<compile_context>
chip_gen: v7x
topology: tpu7x:2x2x1
jax: 0.10.0
libtpu: 0.0.40
codegen_flags: <defaults>
</compile_context>

<pallas_src>
import math

import jax
import jax.numpy as jnp
import numpy as np
from jax.experimental import pallas as pl
from jax.experimental.pallas import tpu as pltpu


def _graph_cnn_kernel(v_ref, a_ref, wl_ref, wi_ref, bias_ref, out_ref):
    f32, bf16 = jnp.float32, jnp.bfloat16
    Bt, N, C = v_ref.shape                  # V block:  [Bt, N, C]      f32
    L, _, F = wl_ref.shape                  # weights:  [L, C, F]       f32 (resident)
    # a_ref block: [Bt, N, L*N] f32 -- free reshape of the original [b,N,L,N].

    Vb = v_ref[...]                                                    # [Bt, N, C]

    # ---- self term: fold batch into M -> one MXU push with M = Bt*N ----
    out_self = jnp.dot(Vb.reshape(Bt * N, C), wi_ref[...],
                       preferred_element_type=f32)                     # [Bt*N, F]

    # ---- neighbour term:  sum_l A_l @ (V @ W_l)  ==  A[N,L*N] @ vw[L*N,F] ----
    # vw[(bt,l), n, f] = (V_bt @ W_l)[n, f], batched over k = (bt, l) so that the
    # reshape below to per-batch (l, n)-major rows is a contiguous merge (no
    # transpose, no A relayout).  Computed in f32, rounded once to bf16.
    Vl = jnp.broadcast_to(Vb[:, None], (Bt, L, N, C)).reshape(Bt * L, N, C)
    Wl = jnp.broadcast_to(wl_ref[...][None], (Bt, L, C, F)).reshape(Bt * L, C, F)
    vw = jnp.einsum('knc,kcf->knf', Vl, Wl,
                    preferred_element_type=f32)                        # [Bt*L, N, F]
    vw = vw.reshape(Bt, L * N, F).astype(bf16)                         # rows = (l, n')

    # Dominant dot: both operands bf16 (0/1 adjacency is exact in bf16) -> native
    # MXU rate with f32 accumulation.  K = L*N is the fused contraction.
    a_bf16 = a_ref[...].astype(bf16)                                   # [Bt, N, L*N]
    nb = jnp.einsum('bnk,bkf->bnf', a_bf16, vw,
                    preferred_element_type=f32)                        # [Bt, N, F]

    out_ref[...] = out_self.reshape(Bt, N, F) + nb + bias_ref[...][None]


def _pick_block_batch(b, N, target_rows=256):
    """Largest divisor Bt of b with Bt*N <= target_rows, keeping >=2 grid steps
    (v7x megacore) whenever b allows it."""
    divisors = [d for d in range(1, b + 1) if b % d == 0]
    fits = [d for d in divisors if d * N <= target_rows] or [1]
    multi = [d for d in fits if b // d >= 2]
    return max(multi) if multi else max(fits)


def prepare_graph_cnn_params(weight_i, weight_list, bias=None):
    """One-time (module-init) packing/casting of the layer parameters.
    Hoisted out of the per-call path per the perf review."""
    wl = jnp.asarray(weight_list, jnp.float32)          # [L, C, F] stacked ParameterList
    L, C, F = wl.shape
    wi = jnp.asarray(weight_i, jnp.float32)             # [C, F]
    if bias is None:
        b = jnp.zeros((1, F), jnp.float32)
    else:
        b = jnp.asarray(bias, jnp.float32).reshape(1, F)
    return {"weight_list": wl, "weight_i": wi, "bias": b}


@jax.jit
def graph_cnn_layer_apply(V, A, params):
    """V: [b,N,C] node features, A: [b,N,L,N] adjacency channels (0/1),
    params from prepare_graph_cnn_params()."""
    f32 = jnp.float32
    b, N, C = V.shape
    L = A.shape[2]
    wl, wi, bias = params["weight_list"], params["weight_i"], params["bias"]
    F = wi.shape[1]

    Bt = _pick_block_batch(b, N)
    steps = b // Bt

    V = V.astype(f32)
    # [b,N,L,N] -> [b,N,L*N] is a contiguous bitcast reshape (no data movement).
    # A stays f32 in HBM; the bf16 downcast happens on the tile inside the kernel.
    A_flat = A.astype(f32).reshape(b, N, L * N)

    # Advisory cost hint so XLA overlaps this small custom call with neighbours.
    flops = 2 * b * N * F * (C * (L + 1) + L * N)
    bytes_accessed = (b * N * L * N * 4 + b * N * C * 4 + b * N * F * 4
                      + L * C * F * 4 + C * F * 4 + F * 4)

    return pl.pallas_call(
        _graph_cnn_kernel,
        out_shape=jax.ShapeDtypeStruct((b, N, F), f32),
        grid_spec=pltpu.PrefetchScalarGridSpec(
            num_scalar_prefetch=0,
            grid=(steps,),
            in_specs=[
                pl.BlockSpec((Bt, N, C), lambda i: (i, 0, 0)),        # V block
                pl.BlockSpec((Bt, N, L * N), lambda i: (i, 0, 0)),    # A block (flat)
                pl.BlockSpec((L, C, F), lambda i: (0, 0, 0)),         # weight_list (resident)
                pl.BlockSpec((C, F), lambda i: (0, 0)),               # weight_i    (resident)
                pl.BlockSpec((1, F), lambda i: (0, 0)),               # bias        (resident)
            ],
            out_specs=pl.BlockSpec((Bt, N, F), lambda i: (i, 0, 0)),
        ),
        compiler_params=pltpu.CompilerParams(
            # Independent batch-tile axis: shards across v7x's two TensorCores;
            # blocks are KiB-scale so default scoped-VMEM is ample on v5e/v6e/v7x.
            dimension_semantics=("parallel",)),
        cost_estimate=pl.CostEstimate(flops=flops, transcendentals=0,
                                      bytes_accessed=bytes_accessed),
    )(V, A_flat, wl, wi, bias)


def graph_cnn_layer_reference(V, A, weight_i, weight_list, bias):
    """float64 numpy mirror of the PyTorch forward."""
    V64 = np.asarray(V, np.float64)
    A64 = np.asarray(A, np.float64)
    wi = np.asarray(weight_i, np.float64)
    wl = np.asarray(weight_list, np.float64)
    b64 = np.asarray(bias, np.float64)
    out = V64 @ wi
    for l in range(A64.shape[2]):
        a = A64[:, :, l, :]                 # [b, N, N]
        n = np.matmul(a, V64)               # [b, N, C]
        out = out + n @ wl[l]
    return out + b64


if __name__ == "__main__":
    # Small shapes consistent with the module (defaults: adj_chans=4, n_filters=64).
    b, N = 4, 16
    n_feats, adj_chans, n_filters = 8, 4, 64

    key = jax.random.PRNGKey(0)
    k_wi, k_wl, k_v, k_a = jax.random.split(key, 4)

    def xavier(k, shape):
        bound = math.sqrt(6.0 / (shape[-2] + shape[-1]))
        return jax.random.uniform(k, shape, jnp.float32, -bound, bound)

    # Parameters mirroring GraphCNNLayer.reset_parameters()
    weight_i = xavier(k_wi, (n_feats, n_filters))
    weight_list = xavier(k_wl, (adj_chans, n_feats, n_filters))   # stacked ParameterList
    bias = jnp.full((n_filters,), 0.01, jnp.float32)

    V = jax.random.normal(k_v, (b, N, n_feats), jnp.float32)
    A = (jax.random.uniform(k_a, (b, N, adj_chans, N)) > 0.5).astype(jnp.float32)

    params = prepare_graph_cnn_params(weight_i, weight_list, bias)   # hoisted, once

    out = graph_cnn_layer_apply(V, A, params)
    jax.block_until_ready(out)

    ref = graph_cnn_layer_reference(V, A, weight_i, weight_list, bias)
    # Tolerance reflects the bf16 MXU operands on the dominant neighbour matmul
    # (f32 accumulation); the self term stays full f32.
    np.testing.assert_allclose(np.asarray(out), ref, rtol=2e-2, atol=2e-2)

    print("KERNEL_OK")
</pallas_src>

<mosaic_0001>
module attributes {stable_mosaic.version = 11 : i64} {
  func.func @_graph_cnn_kernel(%arg0: i32, %arg1: memref<2x16x8xf32, #tpu.memory_space<vmem>>, %arg2: memref<2x16x64xf32, #tpu.memory_space<vmem>>, %arg3: memref<4x8x64xf32, #tpu.memory_space<vmem>>, %arg4: memref<8x64xf32, #tpu.memory_space<vmem>>, %arg5: memref<1x64xf32, #tpu.memory_space<vmem>>, %arg6: memref<2x16x64xf32, #tpu.memory_space<vmem>>) attributes {dimension_semantics = [#tpu.dimension_semantics<parallel>], iteration_bounds = array<i64: 2>, scalar_prefetch = 0 : i64, scratch_operands = 0 : i64, tpu.core_type = #tpu.core_type<tc>, window_params = [{transform_indices = @transform_0, window_bounds = array<i64: 2, 16, 8>}, {transform_indices = @transform_1, window_bounds = array<i64: 2, 16, 64>}, {pipeline_mode = #tpu.pipeline_mode<synchronous>, transform_indices = @transform_2, window_bounds = array<i64: 4, 8, 64>}, {pipeline_mode = #tpu.pipeline_mode<synchronous>, transform_indices = @transform_3, window_bounds = array<i64: 8, 64>}, {pipeline_mode = #tpu.pipeline_mode<synchronous>, transform_indices = @transform_4, window_bounds = array<i64: 1, 64>}, {transform_indices = @transform_5, window_bounds = array<i64: 2, 16, 64>}]} {
    %c0 = arith.constant 0 : index
    %c0_0 = arith.constant 0 : index
    %c0_1 = arith.constant 0 : index
    %0 = vector.load %arg1[%c0, %c0_0, %c0_1] : memref<2x16x8xf32, #tpu.memory_space<vmem>>, vector<2x16x8xf32>
    %1 = vector.shape_cast %0 : vector<2x16x8xf32> to vector<32x8xf32>
    %c0_2 = arith.constant 0 : index
    %c0_3 = arith.constant 0 : index
    %2 = vector.load %arg4[%c0_2, %c0_3] : memref<8x64xf32, #tpu.memory_space<vmem>>, vector<8x64xf32>
    %cst = arith.constant dense<0.000000e+00> : vector<32x64xf32>
    %3 = tpu.matmul %1, %2, %cst {dimension_numbers = #tpu.dot_dimension_numbers<[1], [0], [0], [1], [0, 0, 1, 1], [], []>} : vector<32x8xf32>, vector<8x64xf32>, vector<32x64xf32> -> vector<32x64xf32>
    %4 = vector.shape_cast %0 : vector<2x16x8xf32> to vector<2x1x16x8xf32>
    %5 = vector.shape_cast %4 : vector<2x1x16x8xf32> to vector<2x1x16x8xf32>
    %6 = vector.broadcast %5 : vector<2x1x16x8xf32> to vector<2x4x16x8xf32>
    %7 = vector.shape_cast %6 : vector<2x4x16x8xf32> to vector<8x16x8xf32>
    %c0_4 = arith.constant 0 : index
    %c0_5 = arith.constant 0 : index
    %c0_6 = arith.constant 0 : index
    %8 = vector.load %arg3[%c0_4, %c0_5, %c0_6] : memref<4x8x64xf32, #tpu.memory_space<vmem>>, vector<4x8x64xf32>
    %9 = vector.shape_cast %8 : vector<4x8x64xf32> to vector<1x4x8x64xf32>
    %10 = vector.shape_cast %9 : vector<1x4x8x64xf32> to vector<1x4x8x64xf32>
    %11 = vector.broadcast %10 : vector<1x4x8x64xf32> to vector<2x4x8x64xf32>
    %12 = vector.shape_cast %11 : vector<2x4x8x64xf32> to vector<8x8x64xf32>
    "tpu.trace_start"() <{level = 10 : i32, message = "knc,kcf->knf"}> : () -> ()
    %cst_7 = arith.constant dense<0.000000e+00> : vector<8x16x64xf32>
    %13 = tpu.matmul %7, %12, %cst_7 {dimension_numbers = #tpu.dot_dimension_numbers<[2], [1], [1], [2], [0, 0, 0, 1, 1, 2], [0], [0]>} : vector<8x16x8xf32>, vector<8x8x64xf32>, vector<8x16x64xf32> -> vector<8x16x64xf32>
    "tpu.trace_stop"() : () -> ()
    %14 = vector.shape_cast %13 : vector<8x16x64xf32> to vector<2x64x64xf32>
    %15 = arith.truncf %14 : vector<2x64x64xf32> to vector<2x64x64xbf16>
    %c0_8 = arith.constant 0 : index
    %c0_9 = arith.constant 0 : index
    %c0_10 = arith.constant 0 : index
    %16 = vector.load %arg2[%c0_8, %c0_9, %c0_10] : memref<2x16x64xf32, #tpu.memory_space<vmem>>, vector<2x16x64xf32>
    %17 = arith.truncf %16 : vector<2x16x64xf32> to vector<2x16x64xbf16>
    "tpu.trace_start"() <{level = 10 : i32, message = "bnk,bkf->bnf"}> : () -> ()
    %cst_11 = arith.constant dense<0.000000e+00> : vector<2x16x64xf32>
    %18 = tpu.matmul %17, %15, %cst_11 {dimension_numbers = #tpu.dot_dimension_numbers<[2], [1], [1], [2], [0, 0, 0, 1, 1, 2], [0], [0]>} : vector<2x16x64xbf16>, vector<2x64x64xbf16>, vector<2x16x64xf32> -> vector<2x16x64xf32>
    "tpu.trace_stop"() : () -> ()
    %19 = vector.shape_cast %3 : vector<32x64xf32> to vector<2x16x64xf32>
    %20 = arith.addf %19, %18 : vector<2x16x64xf32>
    %c0_12 = arith.constant 0 : index
    %c0_13 = arith.constant 0 : index
    %21 = vector.load %arg5[%c0_12, %c0_13] : memref<1x64xf32, #tpu.memory_space<vmem>>, vector<1x64xf32>
    %22 = vector.shape_cast %21 : vector<1x64xf32> to vector<1x1x64xf32>
    %23 = vector.broadcast %22 : vector<1x1x64xf32> to vector<2x16x64xf32>
    %24 = arith.addf %20, %23 : vector<2x16x64xf32>
    %c0_14 = arith.constant 0 : index
    %c0_15 = arith.constant 0 : index
    %c0_16 = arith.constant 0 : index
    %25 = vector.load %arg6[%c0_14, %c0_15, %c0_16] : memref<2x16x64xf32, #tpu.memory_space<vmem>>, vector<2x16x64xf32>
    tpu.vector_store %arg6[%c0_14, %c0_15, %c0_16], %24 {strides = array<i32>} : memref<2x16x64xf32, #tpu.memory_space<vmem>>, vector<2x16x64xf32>,
    return
  }
  func.func @transform_0(%arg0: i32) -> (i32, i32, i32) {
    %c0_i32 = arith.constant 0 : i32
    %c0_i32_0 = arith.constant 0 : i32
    %c0_i32_1 = arith.constant 0 : i32
    return %arg0, %c0_i32, %c0_i32_0 : i32, i32, i32
  }
  func.func @transform_1(%arg0: i32) -> (i32, i32, i32) {
    %c0_i32 = arith.constant 0 : i32
    %c0_i32_0 = arith.constant 0 : i32
    %c0_i32_1 = arith.constant 0 : i32
    return %arg0, %c0_i32, %c0_i32_0 : i32, i32, i32
  }
  func.func @transform_2(%arg0: i32) -> (i32, i32, i32) {
    %c0_i32 = arith.constant 0 : i32
    %c0_i32_0 = arith.constant 0 : i32
    %c0_i32_1 = arith.constant 0 : i32
    %c0_i32_2 = arith.constant 0 : i32
    return %c0_i32, %c0_i32_0, %c0_i32_1 : i32, i32, i32
  }
  func.func @transform_3(%arg0: i32) -> (i32, i32) {
    %c0_i32 = arith.constant 0 : i32
    %c0_i32_0 = arith.constant 0 : i32
    %c0_i32_1 = arith.constant 0 : i32
    return %c0_i32, %c0_i32_0 : i32, i32
  }
  func.func @transform_4(%arg0: i32) -> (i32, i32) {
    %c0_i32 = arith.constant 0 : i32
    %c0_i32_0 = arith.constant 0 : i32
    %c0_i32_1 = arith.constant 0 : i32
    return %c0_i32, %c0_i32_0 : i32, i32
  }
  func.func @transform_5(%arg0: i32) -> (i32, i32, i32) {
    %c0_i32 = arith.constant 0 : i32
    %c0_i32_0 = arith.constant 0 : i32
    %c0_i32_1 = arith.constant 0 : i32
    return %arg0, %c0_i32, %c0_i32_0 : i32, i32, i32
  }
}

</mosaic_0001>

<llo_original>
// kernel: graph_cnn_layer_apply.1
$region0: #{graph_cnn_layer_apply.1}
  #allocation0 [shape = 'u32[]', space=smem, size = 0x4, offset = 0x4, fixed_abs, tag = 'smem constant byte address 0x4 - core index']
  #allocation1 [shape = 'u32[144,128]{1,0:T(1,128)}', space=vmem, size = 0x12000, scoped, tag = 'internal scratch']
  %s0 = inlined_call_operand.vmem [shape: f32[4,16,8], index: 0, kind: input, shape index: {}]
  %s1 = inlined_call_operand.vmem [shape: f32[4,16,64], index: 1, kind: input, shape index: {}]
  %s2 = inlined_call_operand.vmem [shape: f32[4,8,64], index: 2, kind: input, shape index: {}]
  %s3 = inlined_call_operand.vmem [shape: f32[8,64], index: 3, kind: input, shape index: {}]
  %s4 = inlined_call_operand.vmem [shape: f32[1,64], index: 4, kind: input, shape index: {}]
  %s5 = inlined_call_operand.hbm [shape: f32[4,16,64], index: 5, kind: output, shape index: {}]
  %s6 = sld [smem:[#allocation0]]
  $region53: #{graph_cnn_layer_apply.1} parent=0
    _
  %s8 = ssub.s32 1, %s6
  %s9 = scalar_select 0, %s8, %s6
  $region1: #{graph_cnn_layer_apply.1} parent=0
    #allocation2 [shape = 'u8[32768]{0}', space=vmem, size = 0x8000, scoped, tag = 'output window, operand 0']
    #allocation3 [shape = 's32[2]{0}', space=sflag, size = 0x8, scoped, tag = 'scoped memory for graph_cnn_layer_apply.1']
    %10 = vsyncpa [#allocation3], 0
    %s11 = scalar_lea.sflag [#allocation3], 1
    %12 = vsyncpa %s11, 0
    loop: start=0, step=1, limit=4
    $region2: #{graph_cnn_layer_apply.1} parent=1 // loop_pre_header
      _
    $region3: #{graph_cnn_layer_apply.1} parent=1 // loop_header
      %s14 = sphi 0, %s18
      %p15 = scmp.ge.s32.totalorder %s14, 4
      %s24 = sphi 0, %s26
      %s27 = sphi 0, %s24
      %s28 = sphi 0, %s27
      %s44 = sphi 0, %s28
      %s50 = sphi 0, %s52
      %s53 = sphi 0, %s50
      %s54 = sphi 0, %s53
      %s70 = sphi 0, %s54
      %s74 = sphi 0, %s74
      %s76 = sphi 0, %s74
      %s77 = sphi 0, %s76
      %s91 = sphi 0, %s77
      %s95 = sphi 0, %s95
      %s97 = sphi 0, %s95
      %s98 = sphi 0, %s97
      %s112 = sphi 0, %s98
      %s116 = sphi 0, %s116
      %s118 = sphi 0, %s116
      %s119 = sphi 0, %s118
      %s133 = sphi 0, %s119
      %s139 = sphi 0, %s141
      %s142 = sphi 0, %s139
      %s143 = sphi 0, %s142
      %s159 = sphi 0, %s143
    $region4: #{graph_cnn_layer_apply.1} parent=1 // loop_header_branch
      %17 = sbr.rel (%p15) target = $region8
    $region5: #{graph_cnn_layer_apply.1} parent=1 // loop_body
      %s19 = ssub.s32 %s14, 1
      %s20 = ssub.s32 %s14, 2
      %s21 = sadd.s32 %s14, 1
      %s22 = ssub.s32 %s14, %s21
      %p23 = scmp.eq.s32.totalorder %s22, 0
      %s25 = sadd.s32 %s24, 1
      %s26 = scalar_select %p23, %s24, %s25
      %p29 = pneg %p23
      %p30 = scmp.eq.s32.totalorder %s14, 1
      %p31 = por %p29, %p30
      %p32 = scmp.ne.s32.totalorder %s24, %s27
      %p33 = scmp.eq.s32.totalorder %s14, 0
      %p34 = por %p32, %p33
      %p35 = scmp.ne.s32.totalorder %s24, %s27
      %p36 = scmp.eq.s32.totalorder %s19, 1
      %p37 = por %p35, %p36
      %p38 = scmp.ne.s32.totalorder %s27, %s28
      %p39 = scmp.eq.s32.totalorder %s19, 0
      %p40 = por %p38, %p39
      %p41 = scmp.ne.s32.totalorder %s27, %s28
      %p42 = scmp.eq.s32.totalorder %s20, 1
      %p43 = por %p41, %p42
      %p45 = scmp.ne.s32.totalorder %s28, %s44
      %p46 = scmp.eq.s32.totalorder %s20, 0
      %p47 = por %p45, %p46
      %s48 = ssub.s32 %s14, %s21
      %p49 = scmp.eq.s32.totalorder %s48, 0
      %s51 = sadd.s32 %s50, 1
      %s52 = scalar_select %p49, %s50, %s51
      %p55 = pneg %p49
      %p56 = scmp.eq.s32.totalorder %s14, 1
      %p57 = por %p55, %p56
      %p58 = scmp.ne.s32.totalorder %s50, %s53
      %p59 = scmp.eq.s32.totalorder %s14, 0
      %p60 = por %p58, %p59
      %p61 = scmp.ne.s32.totalorder %s50, %s53
      %p62 = scmp.eq.s32.totalorder %s19, 1
      %p63 = por %p61, %p62
      %p64 = scmp.ne.s32.totalorder %s53, %s54
      %p65 = scmp.eq.s32.totalorder %s19, 0
      %p66 = por %p64, %p65
      %p67 = scmp.ne.s32.totalorder %s53, %s54
      %p68 = scmp.eq.s32.totalorder %s20, 1
      %p69 = por %p67, %p68
      %p71 = scmp.ne.s32.totalorder %s54, %s70
      %p72 = scmp.eq.s32.totalorder %s20, 0
      %p73 = por %p71, %p72
      %s75 = sadd.s32 %s74, 1
      %p78 = scmp.eq.s32.totalorder %s14, 1
      %p79 = scmp.ne.s32.totalorder %s74, %s76
      %p80 = scmp.eq.s32.totalorder %s14, 0
      %p81 = por %p79, %p80
      %p82 = scmp.ne.s32.totalorder %s74, %s76
      %p83 = scmp.eq.s32.totalorder %s19, 1
      %p84 = por %p82, %p83
      %p85 = scmp.ne.s32.totalorder %s76, %s77
      %p86 = scmp.eq.s32.totalorder %s19, 0
      %p87 = por %p85, %p86
      %p88 = scmp.ne.s32.totalorder %s76, %s77
      %p89 = scmp.eq.s32.totalorder %s20, 1
      %p90 = por %p88, %p89
      %p92 = scmp.ne.s32.totalorder %s77, %s91
      %p93 = scmp.eq.s32.totalorder %s20, 0
      %p94 = por %p92, %p93
      %s96 = sadd.s32 %s95, 1
      %p99 = scmp.eq.s32.totalorder %s14, 1
      %p100 = scmp.ne.s32.totalorder %s95, %s97
      %p101 = scmp.eq.s32.totalorder %s14, 0
      %p102 = por %p100, %p101
      %p103 = scmp.ne.s32.totalorder %s95, %s97
      %p104 = scmp.eq.s32.totalorder %s19, 1
      %p105 = por %p103, %p104
      %p106 = scmp.ne.s32.totalorder %s97, %s98
      %p107 = scmp.eq.s32.totalorder %s19, 0
      %p108 = por %p106, %p107
      %p109 = scmp.ne.s32.totalorder %s97, %s98
      %p110 = scmp.eq.s32.totalorder %s20, 1
      %p111 = por %p109, %p110
      %p113 = scmp.ne.s32.totalorder %s98, %s112
      %p114 = scmp.eq.s32.totalorder %s20, 0
      %p115 = por %p113, %p114
      %s117 = sadd.s32 %s116, 1
      %p120 = scmp.eq.s32.totalorder %s14, 1
      %p121 = scmp.ne.s32.totalorder %s116, %s118
      %p122 = scmp.eq.s32.totalorder %s14, 0
      %p123 = por %p121, %p122
      %p124 = scmp.ne.s32.totalorder %s116, %s118
      %p125 = scmp.eq.s32.totalorder %s19, 1
      %p126 = por %p124, %p125
      %p127 = scmp.ne.s32.totalorder %s118, %s119
      %p128 = scmp.eq.s32.totalorder %s19, 0
      %p129 = por %p127, %p128
      %p130 = scmp.ne.s32.totalorder %s118, %s119
      %p131 = scmp.eq.s32.totalorder %s20, 1
      %p132 = por %p130, %p131
      %p134 = scmp.ne.s32.totalorder %s119, %s133
      %p135 = scmp.eq.s32.totalorder %s20, 0
      %p136 = por %p134, %p135
      %s137 = ssub.s32 %s14, %s21
      %p138 = scmp.eq.s32.totalorder %s137, 0
      %s140 = sadd.s32 %s139, 1
      %s141 = scalar_select %p138, %s139, %s140
      %p144 = pneg %p138
      %p145 = scmp.eq.s32.totalorder %s14, 1
      %p146 = por %p144, %p145
      %p147 = scmp.ne.s32.totalorder %s139, %s142
      %p148 = scmp.eq.s32.totalorder %s14, 0
      %p149 = por %p147, %p148
      %p150 = scmp.ne.s32.totalorder %s139, %s142
      %p151 = scmp.eq.s32.totalorder %s19, 1
      %p152 = por %p150, %p151
      %p153 = scmp.ne.s32.totalorder %s142, %s143
      %p154 = scmp.eq.s32.totalorder %s19, 0
      %p155 = por %p153, %p154
      %p156 = scmp.ne.s32.totalorder %s142, %s143
      %p157 = scmp.eq.s32.totalorder %s20, 1
      %p158 = por %p156, %p157
      %p160 = scmp.ne.s32.totalorder %s143, %s159
      %p161 = scmp.eq.s32.totalorder %s20, 0
      %p162 = por %p160, %p161
      %p163 = scmp.le.s32.totalorder 1, %s14
      %p164 = scmp.lt.s32.totalorder %s14, 3
      %p165 = pnand %p163, %p164
      %p166 = pneg %p165
      // Predicated region
      $region9: #{graph_cnn_layer_apply.1} parent=5 // pred_check
        _
      $region10: #{graph_cnn_layer_apply.1} parent=5 // pred_check_branch
        %168 = sbr.rel (%p165) target = $region12
      $region11: #{graph_cnn_layer_apply.1} parent=5 // pred_region
        %s169 = ssub.s32 %s14, 1
        // Predicated region
        $region13: #{graph_cnn_layer_apply.1} parent=11 // pred_check
          %p170 = pneg %p87
        $region14: #{graph_cnn_layer_apply.1} parent=11 // pred_check_branch
          %172 = sbr.rel (%p170) target = $region16
        $region15: #{graph_cnn_layer_apply.1} parent=11 // pred_region
          _
        $region16: #{graph_cnn_layer_apply.1} parent=11 // pred_fallthru
          _
        // Predicated region
        $region17: #{graph_cnn_layer_apply.1} parent=11 // pred_check
          %p173 = pneg %p108
        $region18: #{graph_cnn_layer_apply.1} parent=11 // pred_check_branch
          %175 = sbr.rel (%p173) target = $region20
        $region19: #{graph_cnn_layer_apply.1} parent=11 // pred_region
          _
        $region20: #{graph_cnn_layer_apply.1} parent=11 // pred_fallthru
          _
        // Predicated region
        $region21: #{graph_cnn_layer_apply.1} parent=11 // pred_check
          %p176 = pneg %p129
        $region22: #{graph_cnn_layer_apply.1} parent=11 // pred_check_branch
          %178 = sbr.rel (%p176) target = $region24
        $region23: #{graph_cnn_layer_apply.1} parent=11 // pred_region
          _
        $region24: #{graph_cnn_layer_apply.1} parent=11 // pred_fallthru
          _
      $region12: #{graph_cnn_layer_apply.1} parent=5 // pred_fallthru
        _
      %p179 = scmp.lt.s32.totalorder %s14, 2
      // Predicated region
      $region25: #{graph_cnn_layer_apply.1} parent=5 // pred_check
        %p180 = pneg %p179
      $region26: #{graph_cnn_layer_apply.1} parent=5 // pred_check_branch
        %182 = sbr.rel (%p180) target = $region28
      $region27: #{graph_cnn_layer_apply.1} parent=5 // pred_region
        // Predicated region
        $region29: #{graph_cnn_layer_apply.1} parent=27 // pred_check
          %p183 = pneg %p34
        $region30: #{graph_cnn_layer_apply.1} parent=27 // pred_check_branch
          %185 = sbr.rel (%p183) target = $region32
        $region31: #{graph_cnn_layer_apply.1} parent=27 // pred_region
          %s186 = smul.u32 2, %s14
          %p187 = scmp.lt.s32.totalorder %s186, 3
          %s188 = scalar_select %p187, %s186, 3
          %s189 = smul.addr %s188, 2
          %s190 = smul.addr %s189, 8
          %s191 = scalar_lea.vmem %s0, %s190
          %s192 = smul.u32 2, %s14
        $region32: #{graph_cnn_layer_apply.1} parent=27 // pred_fallthru
          _
        // Predicated region
        $region33: #{graph_cnn_layer_apply.1} parent=27 // pred_check
          %p193 = pneg %p60
        $region34: #{graph_cnn_layer_apply.1} parent=27 // pred_check_branch
          %195 = sbr.rel (%p193) target = $region36
        $region35: #{graph_cnn_layer_apply.1} parent=27 // pred_region
          %s196 = smul.u32 2, %s14
          %p197 = scmp.lt.s32.totalorder %s196, 3
          %s198 = scalar_select %p197, %s196, 3
          %s199 = smul.addr %s198, 2
          %s200 = smul.addr %s199, 8
          %s201 = scalar_lea.vmem %s1, %s200
          %s202 = smul.u32 2, %s14
        $region36: #{graph_cnn_layer_apply.1} parent=27 // pred_fallthru
          _
      $region28: #{graph_cnn_layer_apply.1} parent=5 // pred_fallthru
        _
      %p203 = scmp.le.s32.totalorder 1, %s14
      %p204 = scmp.lt.s32.totalorder %s14, 3
      %p205 = pnand %p203, %p204
      %p206 = pneg %p205
      // Predicated region
      $region37: #{graph_cnn_layer_apply.1} parent=5 // pred_check
        _
      $region38: #{graph_cnn_layer_apply.1} parent=5 // pred_check_branch
        %208 = sbr.rel (%p205) target = $region40
      $region39: #{graph_cnn_layer_apply.1} parent=5 // pred_region
        %s209 = ssub.s32 %s14, 1
        %s210 = smul.u32 2, %s19
        %p211 = scmp.lt.s32.totalorder %s210, 3
        %s212 = scalar_select %p211, %s210, 3
        %s213 = smul.addr %s212, 2
        %s214 = smul.addr %s213, 8
        %s215 = scalar_lea.vmem %s0, %s214
        %p216 = pneg %p40
        %p217 = pneg %p37
        %s218 = smul.u32 2, %s19
        %p219 = scmp.lt.s32.totalorder %s218, 3
        %s220 = scalar_select %p219, %s218, 3
        %s221 = smul.addr %s220, 2
        %s222 = smul.addr %s221, 8
        %s223 = scalar_lea.vmem %s1, %s222
        %p224 = pneg %p66
        %p225 = pneg %p63
        %p226 = pneg %p87
        %p227 = pneg %p84
        %p228 = pneg %p108
        %p229 = pneg %p105
        %p230 = pneg %p129
        %p231 = pneg %p126
        %p232 = pneg %p155
        %p233 = pneg %p152
        %s234 = sand.u32 %s142, 1
        %s235 = scalar_lea.sflag [#allocation3], %s234
        %s236 = sand.u32 %s142, 1
        %s237 = smul.addr %s236, 32
        %s238 = scalar_lea.vmem [#allocation2], %s237
        %s239 = smul.u32 2, %s19
        %p240 = scmp.lt.s32.totalorder %s239, 3
        %s241 = scalar_select %p240, %s239, 3
        %s242 = smul.addr %s241, 2
        %s243 = smul.addr %s242, 8
        %s244 = scalar_lea.vmem %s0, %s243
        %s245 = smul.u32 2, %s19
        %s246 = smul.u32 2, %s19
        %p247 = scmp.lt.s32.totalorder %s246, 3
        %s248 = scalar_select %p247, %s246, 3
        %s249 = smul.addr %s248, 2
        %s250 = smul.addr %s249, 8
        %s251 = scalar_lea.vmem %s1, %s250
        %s252 = smul.u32 2, %s19
        %s253 = smul.u32 2, %s19
        %v255 = vld [vmem:[%s244] sm:$0xff]
        %v256 = vld [vmem:[%s244 + $0x8] sm:$0xff]
        %v257 = vld [vmem:[%s244 + $0x10] sm:$0xff]
        %v258 = vld [vmem:[%s244 + $0x18] sm:$0xff]
        %v259 = vld [vmem:[%s3] sm:$0xff]
        %vm260 = vcmask 64512
        %v262 = vsel %vm260, %v255, 0
        %v265 = vsel %vm260, %v256, 0
        %v268 = vsel %vm260, %v257, 0
        %v271 = vsel %vm260, %v258, 0
        %273 = vmatprep.subr.mxu0 0.0
        %274 = vmatpush1.msra.mxu0 %v259
        %275 = vmatprep.subr.mxu0 0.0
        %276 = vmatpush1.msra.mxu0 0.0
        %277 = vmatprep.subr.mxu0 0.0
        %278 = vmatpush1.msra.mxu0 0.0
        %279 = vmatprep.subr.mxu0 0.0
        %280 = vmatpush1.msra.mxu0 0.0
        %281 = vmatprep.subr.mxu0 0.0
        %282 = vmatpush1.msra.mxu0 0.0
        %283 = vmatprep.subr.mxu0 0.0
        %284 = vmatpush1.msra.mxu0 0.0
        %285 = vmatprep.subr.mxu0 0.0
        %286 = vmatpush1.msra.mxu0 0.0
        %287 = vmatprep.subr.mxu0 0.0
        %288 = vmatpush1.msra.mxu0 0.0
        %289 = vmatprep.subr.mxu0 0.0
        %290 = vmatpush1.msra.mxu0 0.0
        %291 = vmatprep.subr.mxu0 0.0
        %292 = vmatpush1.msra.mxu0 0.0
        %293 = vmatprep.subr.mxu0 0.0
        %294 = vmatpush1.msra.mxu0 0.0
        %295 = vmatprep.subr.mxu0 0.0
        %296 = vmatpush1.msra.mxu0 0.0
        %297 = vmatprep.subr.mxu0 0.0
        %298 = vmatpush1.msra.mxu0 0.0
        %299 = vmatprep.subr.mxu0 0.0
        %300 = vmatpush1.msra.mxu0 0.0
        %301 = vmatprep.subr.mxu0 0.0
        %302 = vmatpush1.msra.mxu0 0.0
        %303 = vmatprep.subr.mxu0 0.0
        %304 = vmatpush1.msra.mxu0 0.0
        %305 = vmatprep.subr.mxu0 0.0
        %306 = vmatpush1.msra.mxu0 0.0
        %307 = vmatprep.subr.mxu0 0.0
        %308 = vmatpush1.msra.mxu0 0.0
        %309 = vmatprep.subr.mxu0 0.0
        %310 = vmatpush1.msra.mxu0 0.0
        %311 = vmatprep.subr.mxu0 0.0
        %312 = vmatpush1.msra.mxu0 0.0
        %313 = vmatprep.subr.mxu0 0.0
        %314 = vmatpush1.msra.mxu0 0.0
        %315 = vmatprep.subr.mxu0 0.0
        %316 = vmatpush1.msra.mxu0 0.0
        %317 = vmatprep.subr.mxu0 0.0
        %318 = vmatpush1.msra.mxu0 0.0
        %319 = vmatprep.subr.mxu0 0.0
        %320 = vmatpush1.msra.mxu0 0.0
        %321 = vmatprep.subr.mxu0 0.0
        %322 = vmatpush1.msra.mxu0 0.0
        %323 = vmatprep.subr.mxu0 0.0
        %324 = vmatpush1.msra.mxu0 0.0
        %325 = vmatprep.subr.mxu0 0.0
        %326 = vmatpush1.msra.mxu0 0.0
        %327 = vmatprep.subr.mxu0 0.0
        %328 = vmatpush1.msra.mxu0 0.0
        %329 = vmatprep.subr.mxu0 0.0
        %330 = vmatpush1.msra.mxu0 0.0
        %331 = vmatprep.subr.mxu0 0.0
        %332 = vmatpush1.msra.mxu0 0.0
        %333 = vmatprep.subr.mxu0 0.0
        %334 = vmatpush1.msra.mxu0 0.0
        %335 = vmatprep.subr.mxu0 0.0
        %336 = vmatpush1.msra.mxu0 0.0
        %337 = vmatprep.mubr.f32.mxu0 0.0
        %338 = vmatmul.mubr.f32.gmra.mrb[0].mxu0 %v262
        %v339 = vpop.f32.mrb[0].mxu0
        %v340 = vadd.f32 0.0, %v339
        %v341 = vpop.f32.mrb[0].mxu0
        %342 = vmatprep.mubr.f32.mxu0 0.0
        %343 = vmatmul.mubr.f32.gmra.mrb[0].mxu0 %v265
        %v344 = vpop.f32.mrb[0].mxu0
        %v345 = vadd.f32 0.0, %v344
        %v346 = vpop.f32.mrb[0].mxu0
        %347 = vmatprep.mubr.f32.mxu0 0.0
        %348 = vmatmul.mubr.f32.gmra.mrb[0].mxu0 %v268
        %v349 = vpop.f32.mrb[0].mxu0
        %v350 = vadd.f32 0.0, %v349
        %v351 = vpop.f32.mrb[0].mxu0
        %352 = vmatprep.mubr.f32.mxu0 0.0
        %353 = vmatmul.mubr.f32.gmra.mrb[0].mxu0 %v271
        %v354 = vpop.f32.mrb[0].mxu0
        %v355 = vadd.f32 0.0, %v354
        %v356 = vpop.f32.mrb[0].mxu0
        %357 = vdwg.mxu0
        %v358 = vld [vmem:[%s2] sm:$0xff]
        %v359 = vld [vmem:[%s2 + $0x8] sm:$0xff]
        %v360 = vld [vmem:[%s2 + $0x10] sm:$0xff]
        %v361 = vld [vmem:[%s2 + $0x18] sm:$0xff]
        %362 = vmatprep.subr.mxu0 0.0
        %363 = vmatpush1.msra.mxu0 %v358
        %364 = vmatprep.subr.mxu0 0.0
        %365 = vmatpush1.msra.mxu0 0.0
        %366 = vmatprep.subr.mxu0 0.0
        %367 = vmatpush1.msra.mxu0 0.0
        %368 = vmatprep.subr.mxu0 0.0
        %369 = vmatpush1.msra.mxu0 0.0
        %370 = vmatprep.subr.mxu0 0.0
        %371 = vmatpush1.msra.mxu0 0.0
        %372 = vmatprep.subr.mxu0 0.0
        %373 = vmatpush1.msra.mxu0 0.0
        %374 = vmatprep.subr.mxu0 0.0
        %375 = vmatpush1.msra.mxu0 0.0
        %376 = vmatprep.subr.mxu0 0.0
        %377 = vmatpush1.msra.mxu0 0.0
        %378 = vmatprep.subr.mxu0 0.0
        %379 = vmatpush1.msra.mxu0 0.0
        %380 = vmatprep.subr.mxu0 0.0
        %381 = vmatpush1.msra.mxu0 0.0
        %382 = vmatprep.subr.mxu0 0.0
        %383 = vmatpush1.msra.mxu0 0.0
        %384 = vmatprep.subr.mxu0 0.0
        %385 = vmatpush1.msra.mxu0 0.0
        %386 = vmatprep.subr.mxu0 0.0
        %387 = vmatpush1.msra.mxu0 0.0
        %388 = vmatprep.subr.mxu0 0.0
        %389 = vmatpush1.msra.mxu0 0.0
        %390 = vmatprep.subr.mxu0 0.0
        %391 = vmatpush1.msra.mxu0 0.0
        %392 = vmatprep.subr.mxu0 0.0
        %393 = vmatpush1.msra.mxu0 0.0
        %394 = vmatprep.subr.mxu0 0.0
        %395 = vmatpush1.msra.mxu0 0.0
        %396 = vmatprep.subr.mxu0 0.0
        %397 = vmatpush1.msra.mxu0 0.0
        %398 = vmatprep.subr.mxu0 0.0
        %399 = vmatpush1.msra.mxu0 0.0
        %400 = vmatprep.subr.mxu0 0.0
        %401 = vmatpush1.msra.mxu0 0.0
        %402 = vmatprep.subr.mxu0 0.0
        %403 = vmatpush1.msra.mxu0 0.0
        %404 = vmatprep.subr.mxu0 0.0
        %405 = vmatpush1.msra.mxu0 0.0
        %406 = vmatprep.subr.mxu0 0.0
        %407 = vmatpush1.msra.mxu0 0.0
        %408 = vmatprep.subr.mxu0 0.0
        %409 = vmatpush1.msra.mxu0 0.0
        %410 = vmatprep.subr.mxu0 0.0
        %411 = vmatpush1.msra.mxu0 0.0
        %412 = vmatprep.subr.mxu0 0.0
        %413 = vmatpush1.msra.mxu0 0.0
        %414 = vmatprep.subr.mxu0 0.0
        %415 = vmatpush1.msra.mxu0 0.0
        %416 = vmatprep.subr.mxu0 0.0
        %417 = vmatpush1.msra.mxu0 0.0
        %418 = vmatprep.subr.mxu0 0.0
        %419 = vmatpush1.msra.mxu0 0.0
        %420 = vmatprep.subr.mxu0 0.0
        %421 = vmatpush1.msra.mxu0 0.0
        %422 = vmatprep.subr.mxu0 0.0
        %423 = vmatpush1.msra.mxu0 0.0
        %424 = vmatprep.subr.mxu0 0.0
        %425 = vmatpush1.msra.mxu0 0.0
        %426 = vmatprep.mubr.f32.mxu0 0.0
        %427 = vmatmul.mubr.f32.gmra.mrb[0].mxu0 %v262
        %v428 = vpop.f32.mrb[0].mxu0
        %v429 = vadd.f32 0.0, %v428
        %v430 = vpop.f32.mrb[0].mxu0
        %431 = vmatprep.mubr.f32.mxu0 0.0
        %432 = vmatmul.mubr.f32.gmra.mrb[0].mxu0 %v265
        %v433 = vpop.f32.mrb[0].mxu0
        %v434 = vadd.f32 0.0, %v433
        %v435 = vpop.f32.mrb[0].mxu0
        %436 = vdwg.mxu0
        %437 = vmatprep.subr.mxu0 0.0
        %438 = vmatpush1.msra.mxu0 %v359
        %439 = vmatprep.subr.mxu0 0.0
        %440 = vmatpush1.msra.mxu0 0.0
        %441 = vmatprep.subr.mxu0 0.0
        %442 = vmatpush1.msra.mxu0 0.0
        %443 = vmatprep.subr.mxu0 0.0
        %444 = vmatpush1.msra.mxu0 0.0
        %445 = vmatprep.subr.mxu0 0.0
        %446 = vmatpush1.msra.mxu0 0.0
        %447 = vmatprep.subr.mxu0 0.0
        %448 = vmatpush1.msra.mxu0 0.0
        %449 = vmatprep.subr.mxu0 0.0
        %450 = vmatpush1.msra.mxu0 0.0
        %451 = vmatprep.subr.mxu0 0.0
        %452 = vmatpush1.msra.mxu0 0.0
        %453 = vmatprep.subr.mxu0 0.0
        %454 = vmatpush1.msra.mxu0 0.0
        %455 = vmatprep.subr.mxu0 0.0
        %456 = vmatpush1.msra.mxu0 0.0
        %457 = vmatprep.subr.mxu0 0.0
        %458 = vmatpush1.msra.mxu0 0.0
        %459 = vmatprep.subr.mxu0 0.0
        %460 = vmatpush1.msra.mxu0 0.0
        %461 = vmatprep.subr.mxu0 0.0
        %462 = vmatpush1.msra.mxu0 0.0
        %463 = vmatprep.subr.mxu0 0.0
        %464 = vmatpush1.msra.mxu0 0.0
        %465 = vmatprep.subr.mxu0 0.0
        %466 = vmatpush1.msra.mxu0 0.0
        %467 = vmatprep.subr.mxu0 0.0
        %468 = vmatpush1.msra.mxu0 0.0
        %469 = vmatprep.subr.mxu0 0.0
        %470 = vmatpush1.msra.mxu0 0.0
        %471 = vmatprep.subr.mxu0 0.0
        %472 = vmatpush1.msra.mxu0 0.0
        %473 = vmatprep.subr.mxu0 0.0
        %474 = vmatpush1.msra.mxu0 0.0
        %475 = vmatprep.subr.mxu0 0.0
        %476 = vmatpush1.msra.mxu0 0.0
        %477 = vmatprep.subr.mxu0 0.0
        %478 = vmatpush1.msra.mxu0 0.0
        %479 = vmatprep.subr.mxu0 0.0
        %480 = vmatpush1.msra.mxu0 0.0
        %481 = vmatprep.subr.mxu0 0.0
        %482 = vmatpush1.msra.mxu0 0.0
        %483 = vmatprep.subr.mxu0 0.0
        %484 = vmatpush1.msra.mxu0 0.0
        %485 = vmatprep.subr.mxu0 0.0
        %486 = vmatpush1.msra.mxu0 0.0
        %487 = vmatprep.subr.mxu0 0.0
        %488 = vmatpush1.msra.mxu0 0.0
        %489 = vmatprep.subr.mxu0 0.0
        %490 = vmatpush1.msra.mxu0 0.0
        %491 = vmatprep.subr.mxu0 0.0
        %492 = vmatpush1.msra.mxu0 0.0
        %493 = vmatprep.subr.mxu0 0.0
        %494 = vmatpush1.msra.mxu0 0.0
        %495 = vmatprep.subr.mxu0 0.0
        %496 = vmatpush1.msra.mxu0 0.0
        %497 = vmatprep.subr.mxu0 0.0
        %498 = vmatpush1.msra.mxu0 0.0
        %499 = vmatprep.subr.mxu0 0.0
        %500 = vmatpush1.msra.mxu0 0.0
        %501 = vmatprep.mubr.f32.mxu0 0.0
        %502 = vmatmul.mubr.f32.gmra.mrb[0].mxu0 %v262
        %v503 = vpop.f32.mrb[0].mxu0
        %v504 = vadd.f32 0.0, %v503
        %v505 = vpop.f32.mrb[0].mxu0
        %506 = vmatprep.mubr.f32.mxu0 0.0
        %507 = vmatmul.mubr.f32.gmra.mrb[0].mxu0 %v265
        %v508 = vpop.f32.mrb[0].mxu0
        %v509 = vadd.f32 0.0, %v508
        %v510 = vpop.f32.mrb[0].mxu0
        %511 = vdwg.mxu0
        %512 = vmatprep.subr.mxu0 0.0
        %513 = vmatpush1.msra.mxu0 %v360
        %514 = vmatprep.subr.mxu0 0.0
        %515 = vmatpush1.msra.mxu0 0.0
        %516 = vmatprep.subr.mxu0 0.0
        %517 = vmatpush1.msra.mxu0 0.0
        %518 = vmatprep.subr.mxu0 0.0
        %519 = vmatpush1.msra.mxu0 0.0
        %520 = vmatprep.subr.mxu0 0.0
        %521 = vmatpush1.msra.mxu0 0.0
        %522 = vmatprep.subr.mxu0 0.0
        %523 = vmatpush1.msra.mxu0 0.0
        %524 = vmatprep.subr.mxu0 0.0
        %525 = vmatpush1.msra.mxu0 0.0
        %526 = vmatprep.subr.mxu0 0.0
        %527 = vmatpush1.msra.mxu0 0.0
        %528 = vmatprep.subr.mxu0 0.0
        %529 = vmatpush1.msra.mxu0 0.0
        %530 = vmatprep.subr.mxu0 0.0
        %531 = vmatpush1.msra.mxu0 0.0
        %532 = vmatprep.subr.mxu0 0.0
        %533 = vmatpush1.msra.mxu0 0.0
        %534 = vmatprep.subr.mxu0 0.0
        %535 = vmatpush1.msra.mxu0 0.0
        %536 = vmatprep.subr.mxu0 0.0
        %537 = vmatpush1.msra.mxu0 0.0
        %538 = vmatprep.subr.mxu0 0.0
        %539 = vmatpush1.msra.mxu0 0.0
        %540 = vmatprep.subr.mxu0 0.0
        %541 = vmatpush1.msra.mxu0 0.0
        %542 = vmatprep.subr.mxu0 0.0
        %543 = vmatpush1.msra.mxu0 0.0
        %544 = vmatprep.subr.mxu0 0.0
        %545 = vmatpush1.msra.mxu0 0.0
        %546 = vmatprep.subr.mxu0 0.0
        %547 = vmatpush1.msra.mxu0 0.0
        %548 = vmatprep.subr.mxu0 0.0
        %549 = vmatpush1.msra.mxu0 0.0
        %550 = vmatprep.subr.mxu0 0.0
        %551 = vmatpush1.msra.mxu0 0.0
        %552 = vmatprep.subr.mxu0 0.0
        %553 = vmatpush1.msra.mxu0 0.0
        %554 = vmatprep.subr.mxu0 0.0
        %555 = vmatpush1.msra.mxu0 0.0
        %556 = vmatprep.subr.mxu0 0.0
        %557 = vmatpush1.msra.mxu0 0.0
        %558 = vmatprep.subr.mxu0 0.0
        %559 = vmatpush1.msra.mxu0 0.0
        %560 = vmatprep.subr.mxu0 0.0
        %561 = vmatpush1.msra.mxu0 0.0
        %562 = vmatprep.subr.mxu0 0.0
        %563 = vmatpush1.msra.mxu0 0.0
        %564 = vmatprep.subr.mxu0 0.0
        %565 = vmatpush1.msra.mxu0 0.0
        %566 = vmatprep.subr.mxu0 0.0
        %567 = vmatpush1.msra.mxu0 0.0
        %568 = vmatprep.subr.mxu0 0.0
        %569 = vmatpush1.msra.mxu0 0.0
        %570 = vmatprep.subr.mxu0 0.0
        %571 = vmatpush1.msra.mxu0 0.0
        %572 = vmatprep.subr.mxu0 0.0
        %573 = vmatpush1.msra.mxu0 0.0
        %574 = vmatprep.subr.mxu0 0.0
        %575 = vmatpush1.msra.mxu0 0.0
        %576 = vmatprep.mubr.f32.mxu0 0.0
        %577 = vmatmul.mubr.f32.gmra.mrb[0].mxu0 %v262
        %v578 = vpop.f32.mrb[0].mxu0
        %v579 = vadd.f32 0.0, %v578
        %v580 = vpop.f32.mrb[0].mxu0
        %581 = vmatprep.mubr.f32.mxu0 0.0
        %582 = vmatmul.mubr.f32.gmra.mrb[0].mxu0 %v265
        %v583 = vpop.f32.mrb[0].mxu0
        %v584 = vadd.f32 0.0, %v583
        %v585 = vpop.f32.mrb[0].mxu0
        %586 = vdwg.mxu0
        %587 = vmatprep.subr.mxu0 0.0
        %588 = vmatpush1.msra.mxu0 %v361
        %589 = vmatprep.subr.mxu0 0.0
        %590 = vmatpush1.msra.mxu0 0.0
        %591 = vmatprep.subr.mxu0 0.0
        %592 = vmatpush1.msra.mxu0 0.0
        %593 = vmatprep.subr.mxu0 0.0
        %594 = vmatpush1.msra.mxu0 0.0
        %595 = vmatprep.subr.mxu0 0.0
        %596 = vmatpush1.msra.mxu0 0.0
        %597 = vmatprep.subr.mxu0 0.0
        %598 = vmatpush1.msra.mxu0 0.0
        %599 = vmatprep.subr.mxu0 0.0
        %600 = vmatpush1.msra.mxu0 0.0
        %601 = vmatprep.subr.mxu0 0.0
        %602 = vmatpush1.msra.mxu0 0.0
        %603 = vmatprep.subr.mxu0 0.0
        %604 = vmatpush1.msra.mxu0 0.0
        %605 = vmatprep.subr.mxu0 0.0
        %606 = vmatpush1.msra.mxu0 0.0
        %607 = vmatprep.subr.mxu0 0.0
        %608 = vmatpush1.msra.mxu0 0.0
        %609 = vmatprep.subr.mxu0 0.0
        %610 = vmatpush1.msra.mxu0 0.0
        %611 = vmatprep.subr.mxu0 0.0
        %612 = vmatpush1.msra.mxu0 0.0
        %613 = vmatprep.subr.mxu0 0.0
        %614 = vmatpush1.msra.mxu0 0.0
        %615 = vmatprep.subr.mxu0 0.0
        %616 = vmatpush1.msra.mxu0 0.0
        %617 = vmatprep.subr.mxu0 0.0
        %618 = vmatpush1.msra.mxu0 0.0
        %619 = vmatprep.subr.mxu0 0.0
        %620 = vmatpush1.msra.mxu0 0.0
        %621 = vmatprep.subr.mxu0 0.0
        %622 = vmatpush1.msra.mxu0 0.0
        %623 = vmatprep.subr.mxu0 0.0
        %624 = vmatpush1.msra.mxu0 0.0
        %625 = vmatprep.subr.mxu0 0.0
        %626 = vmatpush1.msra.mxu0 0.0
        %627 = vmatprep.subr.mxu0 0.0
        %628 = vmatpush1.msra.mxu0 0.0
        %629 = vmatprep.subr.mxu0 0.0
        %630 = vmatpush1.msra.mxu0 0.0
        %631 = vmatprep.subr.mxu0 0.0
        %632 = vmatpush1.msra.mxu0 0.0
        %633 = vmatprep.subr.mxu0 0.0
        %634 = vmatpush1.msra.mxu0 0.0
        %635 = vmatprep.subr.mxu0 0.0
        %636 = vmatpush1.msra.mxu0 0.0
        %637 = vmatprep.subr.mxu0 0.0
        %638 = vmatpush1.msra.mxu0 0.0
        %639 = vmatprep.subr.mxu0 0.0
        %640 = vmatpush1.msra.mxu0 0.0
        %641 = vmatprep.subr.mxu0 0.0
        %642 = vmatpush1.msra.mxu0 0.0
        %643 = vmatprep.subr.mxu0 0.0
        %644 = vmatpush1.msra.mxu0 0.0
        %645 = vmatprep.subr.mxu0 0.0
        %646 = vmatpush1.msra.mxu0 0.0
        %647 = vmatprep.subr.mxu0 0.0
        %648 = vmatpush1.msra.mxu0 0.0
        %649 = vmatprep.subr.mxu0 0.0
        %650 = vmatpush1.msra.mxu0 0.0
        %651 = vmatprep.mubr.f32.mxu0 0.0
        %652 = vmatmul.mubr.f32.gmra.mrb[0].mxu0 %v262
        %v653 = vpop.f32.mrb[0].mxu0
        %v654 = vadd.f32 0.0, %v653
        %v655 = vpop.f32.mrb[0].mxu0
        %656 = vmatprep.mubr.f32.mxu0 0.0
        %657 = vmatmul.mubr.f32.gmra.mrb[0].mxu0 %v265
        %v658 = vpop.f32.mrb[0].mxu0
        %v659 = vadd.f32 0.0, %v658
        %v660 = vpop.f32.mrb[0].mxu0
        %661 = vdwg.mxu0
        %662 = vmatprep.subr.mxu0 0.0
        %663 = vmatpush1.msra.mxu0 %v358
        %664 = vmatprep.subr.mxu0 0.0
        %665 = vmatpush1.msra.mxu0 0.0
        %666 = vmatprep.subr.mxu0 0.0
        %667 = vmatpush1.msra.mxu0 0.0
        %668 = vmatprep.subr.mxu0 0.0
        %669 = vmatpush1.msra.mxu0 0.0
        %670 = vmatprep.subr.mxu0 0.0
        %671 = vmatpush1.msra.mxu0 0.0
        %672 = vmatprep.subr.mxu0 0.0
        %673 = vmatpush1.msra.mxu0 0.0
        %674 = vmatprep.subr.mxu0 0.0
        %675 = vmatpush1.msra.mxu0 0.0
        %676 = vmatprep.subr.mxu0 0.0
        %677 = vmatpush1.msra.mxu0 0.0
        %678 = vmatprep.subr.mxu0 0.0
        %679 = vmatpush1.msra.mxu0 0.0
        %680 = vmatprep.subr.mxu0 0.0
        %681 = vmatpush1.msra.mxu0 0.0
        %682 = vmatprep.subr.mxu0 0.0
        %683 = vmatpush1.msra.mxu0 0.0
        %684 = vmatprep.subr.mxu0 0.0
        %685 = vmatpush1.msra.mxu0 0.0
        %686 = vmatprep.subr.mxu0 0.0
        %687 = vmatpush1.msra.mxu0 0.0
        %688 = vmatprep.subr.mxu0 0.0
        %689 = vmatpush1.msra.mxu0 0.0
        %690 = vmatprep.subr.mxu0 0.0
        %691 = vmatpush1.msra.mxu0 0.0
        %692 = vmatprep.subr.mxu0 0.0
        %693 = vmatpush1.msra.mxu0 0.0
        %694 = vmatprep.subr.mxu0 0.0
        %695 = vmatpush1.msra.mxu0 0.0
        %696 = vmatprep.subr.mxu0 0.0
        %697 = vmatpush1.msra.mxu0 0.0
        %698 = vmatprep.subr.mxu0 0.0
        %699 = vmatpush1.msra.mxu0 0.0
        %700 = vmatprep.subr.mxu0 0.0
        %701 = vmatpush1.msra.mxu0 0.0
        %702 = vmatprep.subr.mxu0 0.0
        %703 = vmatpush1.msra.mxu0 0.0
        %704 = vmatprep.subr.mxu0 0.0
        %705 = vmatpush1.msra.mxu0 0.0
        %706 = vmatprep.subr.mxu0 0.0
        %707 = vmatpush1.msra.mxu0 0.0
        %708 = vmatprep.subr.mxu0 0.0
        %709 = vmatpush1.msra.mxu0 0.0
        %710 = vmatprep.subr.mxu0 0.0
        %711 = vmatpush1.msra.mxu0 0.0
        %712 = vmatprep.subr.mxu0 0.0
        %713 = vmatpush1.msra.mxu0 0.0
        %714 = vmatprep.subr.mxu0 0.0
        %715 = vmatpush1.msra.mxu0 0.0
        %716 = vmatprep.subr.mxu0 0.0
        %717 = vmatpush1.msra.mxu0 0.0
        %718 = vmatprep.subr.mxu0 0.0
        %719 = vmatpush1.msra.mxu0 0.0
        %720 = vmatprep.subr.mxu0 0.0
        %721 = vmatpush1.msra.mxu0 0.0
        %722 = vmatprep.subr.mxu0 0.0
        %723 = vmatpush1.msra.mxu0 0.0
        %724 = vmatprep.subr.mxu0 0.0
        %725 = vmatpush1.msra.mxu0 0.0
        %726 = vmatprep.mubr.f32.mxu0 0.0
        %727 = vmatmul.mubr.f32.gmra.mrb[0].mxu0 %v268
        %v728 = vpop.f32.mrb[0].mxu0
        %v729 = vadd.f32 0.0, %v728
        %v730 = vpop.f32.mrb[0].mxu0
        %731 = vmatprep.mubr.f32.mxu0 0.0
        %732 = vmatmul.mubr.f32.gmra.mrb[0].mxu0 %v271
        %v733 = vpop.f32.mrb[0].mxu0
        %v734 = vadd.f32 0.0, %v733
        %v735 = vpop.f32.mrb[0].mxu0
        %736 = vdwg.mxu0
        %737 = vmatprep.subr.mxu0 0.0
        %738 = vmatpush1.msra.mxu0 %v359
        %739 = vmatprep.subr.mxu0 0.0
        %740 = vmatpush1.msra.mxu0 0.0
        %741 = vmatprep.subr.mxu0 0.0
        %742 = vmatpush1.msra.mxu0 0.0
        %743 = vmatprep.subr.mxu0 0.0
        %744 = vmatpush1.msra.mxu0 0.0
        %745 = vmatprep.subr.mxu0 0.0
        %746 = vmatpush1.msra.mxu0 0.0
        %747 = vmatprep.subr.mxu0 0.0
        %748 = vmatpush1.msra.mxu0 0.0
        %749 = vmatprep.subr.mxu0 0.0
        %750 = vmatpush1.msra.mxu0 0.0
        %751 = vmatprep.subr.mxu0 0.0
        %752 = vmatpush1.msra.mxu0 0.0
        %753 = vmatprep.subr.mxu0 0.0
        %754 = vmatpush1.msra.mxu0 0.0
        %755 = vmatprep.subr.mxu0 0.0
        %756 = vmatpush1.msra.mxu0 0.0
        %757 = vmatprep.subr.mxu0 0.0
        %758 = vmatpush1.msra.mxu0 0.0
        %759 = vmatprep.subr.mxu0 0.0
        %760 = vmatpush1.msra.mxu0 0.0
        %761 = vmatprep.subr.mxu0 0.0
        %762 = vmatpush1.msra.mxu0 0.0
        %763 = vmatprep.subr.mxu0 0.0
        %764 = vmatpush1.msra.mxu0 0.0
        %765 = vmatprep.subr.mxu0 0.0
        %766 = vmatpush1.msra.mxu0 0.0
        %767 = vmatprep.subr.mxu0 0.0
        %768 = vmatpush1.msra.mxu0 0.0
        %769 = vmatprep.subr.mxu0 0.0
        %770 = vmatpush1.msra.mxu0 0.0
        %771 = vmatprep.subr.mxu0 0.0
        %772 = vmatpush1.msra.mxu0 0.0
        %773 = vmatprep.subr.mxu0 0.0
        %774 = vmatpush1.msra.mxu0 0.0
        %775 = vmatprep.subr.mxu0 0.0
        %776 = vmatpush1.msra.mxu0 0.0
        %777 = vmatprep.subr.mxu0 0.0
        %778 = vmatpush1.msra.mxu0 0.0
        %779 = vmatprep.subr.mxu0 0.0
        %780 = vmatpush1.msra.mxu0 0.0
        %781 = vmatprep.subr.mxu0 0.0
        %782 = vmatpush1.msra.mxu0 0.0
        %783 = vmatprep.subr.mxu0 0.0
        %784 = vmatpush1.msra.mxu0 0.0
        %785 = vmatprep.subr.mxu0 0.0
        %786 = vmatpush1.msra.mxu0 0.0
        %787 = vmatprep.subr.mxu0 0.0
        %788 = vmatpush1.msra.mxu0 0.0
        %789 = vmatprep.subr.mxu0 0.0
        %790 = vmatpush1.msra.mxu0 0.0
        %791 = vmatprep.subr.mxu0 0.0
        %792 = vmatpush1.msra.mxu0 0.0
        %793 = vmatprep.subr.mxu0 0.0
        %794 = vmatpush1.msra.mxu0 0.0
        %795 = vmatprep.subr.mxu0 0.0
        %796 = vmatpush1.msra.mxu0 0.0
        %797 = vmatprep.subr.mxu0 0.0
        %798 = vmatpush1.msra.mxu0 0.0
        %799 = vmatprep.subr.mxu0 0.0
        %800 = vmatpush1.msra.mxu0 0.0
        %801 = vmatprep.mubr.f32.mxu0 0.0
        %802 = vmatmul.mubr.f32.gmra.mrb[0].mxu0 %v268
        %v803 = vpop.f32.mrb[0].mxu0
        %v804 = vadd.f32 0.0, %v803
        %v805 = vpop.f32.mrb[0].mxu0
        %806 = vmatprep.mubr.f32.mxu0 0.0
        %807 = vmatmul.mubr.f32.gmra.mrb[0].mxu0 %v271
        %v808 = vpop.f32.mrb[0].mxu0
        %v809 = vadd.f32 0.0, %v808
        %v810 = vpop.f32.mrb[0].mxu0
        %811 = vdwg.mxu0
        %812 = vmatprep.subr.mxu0 0.0
        %813 = vmatpush1.msra.mxu0 %v360
        %814 = vmatprep.subr.mxu0 0.0
        %815 = vmatpush1.msra.mxu0 0.0
        %816 = vmatprep.subr.mxu0 0.0
        %817 = vmatpush1.msra.mxu0 0.0
        %818 = vmatprep.subr.mxu0 0.0
        %819 = vmatpush1.msra.mxu0 0.0
        %820 = vmatprep.subr.mxu0 0.0
        %821 = vmatpush1.msra.mxu0 0.0
        %822 = vmatprep.subr.mxu0 0.0
        %823 = vmatpush1.msra.mxu0 0.0
        %824 = vmatprep.subr.mxu0 0.0
        %825 = vmatpush1.msra.mxu0 0.0
        %826 = vmatprep.subr.mxu0 0.0
        %827 = vmatpush1.msra.mxu0 0.0
        %828 = vmatprep.subr.mxu0 0.0
        %829 = vmatpush1.msra.mxu0 0.0
        %830 = vmatprep.subr.mxu0 0.0
        %831 = vmatpush1.msra.mxu0 0.0
        %832 = vmatprep.subr.mxu0 0.0
        %833 = vmatpush1.msra.mxu0 0.0
        %834 = vmatprep.subr.mxu0 0.0
        %835 = vmatpush1.msra.mxu0 0.0
        %836 = vmatprep.subr.mxu0 0.0
        %837 = vmatpush1.msra.mxu0 0.0
        %838 = vmatprep.subr.mxu0 0.0
        %839 = vmatpush1.msra.mxu0 0.0
        %840 = vmatprep.subr.mxu0 0.0
        %841 = vmatpush1.msra.mxu0 0.0
        %842 = vmatprep.subr.mxu0 0.0
        %843 = vmatpush1.msra.mxu0 0.0
        %844 = vmatprep.subr.mxu0 0.0
        %845 = vmatpush1.msra.mxu0 0.0
        %846 = vmatprep.subr.mxu0 0.0
        %847 = vmatpush1.msra.mxu0 0.0
        %848 = vmatprep.subr.mxu0 0.0
        %849 = vmatpush1.msra.mxu0 0.0
        %850 = vmatprep.subr.mxu0 0.0
        %851 = vmatpush1.msra.mxu0 0.0
        %852 = vmatprep.subr.mxu0 0.0
        %853 = vmatpush1.msra.mxu0 0.0
        %854 = vmatprep.subr.mxu0 0.0
        %855 = vmatpush1.msra.mxu0 0.0
        %856 = vmatprep.subr.mxu0 0.0
        %857 = vmatpush1.msra.mxu0 0.0
        %858 = vmatprep.subr.mxu0 0.0
        %859 = vmatpush1.msra.mxu0 0.0
        %860 = vmatprep.subr.mxu0 0.0
        %861 = vmatpush1.msra.mxu0 0.0
        %862 = vmatprep.subr.mxu0 0.0
        %863 = vmatpush1.msra.mxu0 0.0
        %864 = vmatprep.subr.mxu0 0.0
        %865 = vmatpush1.msra.mxu0 0.0
        %866 = vmatprep.subr.mxu0 0.0
        %867 = vmatpush1.msra.mxu0 0.0
        %868 = vmatprep.subr.mxu0 0.0
        %869 = vmatpush1.msra.mxu0 0.0
        %870 = vmatprep.subr.mxu0 0.0
        %871 = vmatpush1.msra.mxu0 0.0
        %872 = vmatprep.subr.mxu0 0.0
        %873 = vmatpush1.msra.mxu0 0.0
        %874 = vmatprep.subr.mxu0 0.0
        %875 = vmatpush1.msra.mxu0 0.0
        %876 = vmatprep.mubr.f32.mxu0 0.0
        %877 = vmatmul.mubr.f32.gmra.mrb[0].mxu0 %v268
        %v878 = vpop.f32.mrb[0].mxu0
        %v879 = vadd.f32 0.0, %v878
        %v880 = vpop.f32.mrb[0].mxu0
        %881 = vmatprep.mubr.f32.mxu0 0.0
        %882 = vmatmul.mubr.f32.gmra.mrb[0].mxu0 %v271
        %v883 = vpop.f32.mrb[0].mxu0
        %v884 = vadd.f32 0.0, %v883
        %v885 = vpop.f32.mrb[0].mxu0
        %886 = vdwg.mxu0
        %887 = vmatprep.subr.mxu0 0.0
        %888 = vmatpush1.msra.mxu0 %v361
        %889 = vmatprep.subr.mxu0 0.0
        %890 = vmatpush1.msra.mxu0 0.0
        %891 = vmatprep.subr.mxu0 0.0
        %892 = vmatpush1.msra.mxu0 0.0
        %893 = vmatprep.subr.mxu0 0.0
        %894 = vmatpush1.msra.mxu0 0.0
        %895 = vmatprep.subr.mxu0 0.0
        %896 = vmatpush1.msra.mxu0 0.0
        %897 = vmatprep.subr.mxu0 0.0
        %898 = vmatpush1.msra.mxu0 0.0
        %899 = vmatprep.subr.mxu0 0.0
        %900 = vmatpush1.msra.mxu0 0.0
        %901 = vmatprep.subr.mxu0 0.0
        %902 = vmatpush1.msra.mxu0 0.0
        %903 = vmatprep.subr.mxu0 0.0
        %904 = vmatpush1.msra.mxu0 0.0
        %905 = vmatprep.subr.mxu0 0.0
        %906 = vmatpush1.msra.mxu0 0.0
        %907 = vmatprep.subr.mxu0 0.0
        %908 = vmatpush1.msra.mxu0 0.0
        %909 = vmatprep.subr.mxu0 0.0
        %910 = vmatpush1.msra.mxu0 0.0
        %911 = vmatprep.subr.mxu0 0.0
        %912 = vmatpush1.msra.mxu0 0.0
        %913 = vmatprep.subr.mxu0 0.0
        %914 = vmatpush1.msra.mxu0 0.0
        %915 = vmatprep.subr.mxu0 0.0
        %916 = vmatpush1.msra.mxu0 0.0
        %917 = vmatprep.subr.mxu0 0.0
        %918 = vmatpush1.msra.mxu0 0.0
        %919 = vmatprep.subr.mxu0 0.0
        %920 = vmatpush1.msra.mxu0 0.0
        %921 = vmatprep.subr.mxu0 0.0
        %922 = vmatpush1.msra.mxu0 0.0
        %923 = vmatprep.subr.mxu0 0.0
        %924 = vmatpush1.msra.mxu0 0.0
        %925 = vmatprep.subr.mxu0 0.0
        %926 = vmatpush1.msra.mxu0 0.0
        %927 = vmatprep.subr.mxu0 0.0
        %928 = vmatpush1.msra.mxu0 0.0
        %929 = vmatprep.subr.mxu0 0.0
        %930 = vmatpush1.msra.mxu0 0.0
        %931 = vmatprep.subr.mxu0 0.0
        %932 = vmatpush1.msra.mxu0 0.0
        %933 = vmatprep.subr.mxu0 0.0
        %934 = vmatpush1.msra.mxu0 0.0
        %935 = vmatprep.subr.mxu0 0.0
        %936 = vmatpush1.msra.mxu0 0.0
        %937 = vmatprep.subr.mxu0 0.0
        %938 = vmatpush1.msra.mxu0 0.0
        %939 = vmatprep.subr.mxu0 0.0
        %940 = vmatpush1.msra.mxu0 0.0
        %941 = vmatprep.subr.mxu0 0.0
        %942 = vmatpush1.msra.mxu0 0.0
        %943 = vmatprep.subr.mxu0 0.0
        %944 = vmatpush1.msra.mxu0 0.0
        %945 = vmatprep.subr.mxu0 0.0
        %946 = vmatpush1.msra.mxu0 0.0
        %947 = vmatprep.subr.mxu0 0.0
        %948 = vmatpush1.msra.mxu0 0.0
        %949 = vmatprep.subr.mxu0 0.0
        %950 = vmatpush1.msra.mxu0 0.0
        %951 = vmatprep.mubr.f32.mxu0 0.0
        %952 = vmatmul.mubr.f32.gmra.mrb[0].mxu0 %v268
        %v953 = vpop.f32.mrb[0].mxu0
        %v954 = vadd.f32 0.0, %v953
        %v955 = vpop.f32.mrb[0].mxu0
        %956 = vmatprep.mubr.f32.mxu0 0.0
        %957 = vmatmul.mubr.f32.gmra.mrb[0].mxu0 %v271
        %v958 = vpop.f32.mrb[0].mxu0
        %v959 = vadd.f32 0.0, %v958
        %v960 = vpop.f32.mrb[0].mxu0
        %961 = vdwg.mxu0
        %v962 = vpack.c.bf16 %v434, %v429
        %v963 = vpack.c.bf16 %v509, %v504
        %v964 = vpack.c.bf16 %v584, %v579
        %v965 = vpack.c.bf16 %v659, %v654
        %v966 = vpack.c.bf16 %v734, %v729
        %v967 = vpack.c.bf16 %v809, %v804
        %v968 = vpack.c.bf16 %v884, %v879
        %v969 = vpack.c.bf16 %v959, %v954
        %v970 = vld [vmem:[%s251] sm:$0xff]
        %v971 = vld [vmem:[%s251 + $0x8] sm:$0xff]
        %v972 = vld [vmem:[%s251 + $0x10] sm:$0xff]
        %v973 = vld [vmem:[%s251 + $0x18] sm:$0xff]
        %v974 = vpack.c.bf16 %v971, %v970
        %v975 = vpack.c.bf16 %v973, %v972
        %vm976 = vcmask 523264
        %v978 = vsel %vm976, %v974, 0
        %980 = vmatprep.subr.bf16.mxu0 0
        %981 = vmatpush1.bf16.msra.mxu0 %v962
        %982 = vmatprep.subr.bf16.mxu0 0
        %983 = vmatpush1.bf16.msra.mxu0 %v963
        %984 = vmatprep.subr.bf16.mxu0 0
        %985 = vmatpush1.bf16.msra.mxu0 %v964
        %986 = vmatprep.subr.bf16.mxu0 0
        %987 = vmatpush1.bf16.msra.mxu0 %v965
        %988 = vmatprep.subr.bf16.mxu0 0
        %989 = vmatpush1.bf16.msra.mxu0 0
        %990 = vmatprep.subr.bf16.mxu0 0
        %991 = vmatpush1.bf16.msra.mxu0 0
        %992 = vmatprep.subr.bf16.mxu0 0
        %993 = vmatpush1.bf16.msra.mxu0 0
        %994 = vmatprep.subr.bf16.mxu0 0
        %995 = vmatpush1.bf16.msra.mxu0 0
        %996 = vmatprep.subr.bf16.mxu0 0
        %997 = vmatpush1.bf16.msra.mxu0 0
        %998 = vmatprep.subr.bf16.mxu0 0
        %999 = vmatpush1.bf16.msra.mxu0 0
        %1000 = vmatprep.subr.bf16.mxu0 0
        %1001 = vmatpush1.bf16.msra.mxu0 0
        %1002 = vmatprep.subr.bf16.mxu0 0
        %1003 = vmatpush1.bf16.msra.mxu0 0
        %1004 = vmatprep.subr.bf16.mxu0 0
        %1005 = vmatpush1.bf16.msra.mxu0 0
        %1006 = vmatprep.subr.bf16.mxu0 0
        %1007 = vmatpush1.bf16.msra.mxu0 0
        %1008 = vmatprep.subr.bf16.mxu0 0
        %1009 = vmatpush1.bf16.msra.mxu0 0
        %1010 = vmatprep.subr.bf16.mxu0 0
        %1011 = vmatpush1.bf16.msra.mxu0 0
        %1012 = vmatprep.mubr.bf16.mxu0 0
        %1013 = vmatmul.mubr.bf16.gmra.mrb[0].mxu0 %v978
        %v1014 = vpop.f32.mrb[0].mxu0
        %v1015 = vadd.f32 0.0, %v1014
        %v1016 = vpop.f32.mrb[0].mxu0
        %v1017 = vpop.f32.mrb[0].mxu0
        %v1018 = vadd.f32 0.0, %v1017
        %v1019 = vpop.f32.mrb[0].mxu0
        %1020 = vdwg.mxu0
        %v1022 = vsel %vm976, %v975, 0
        %1024 = vmatprep.subr.bf16.mxu0 0
        %1025 = vmatpush1.bf16.msra.mxu0 %v966
        %1026 = vmatprep.subr.bf16.mxu0 0
        %1027 = vmatpush1.bf16.msra.mxu0 %v967
        %1028 = vmatprep.subr.bf16.mxu0 0
        %1029 = vmatpush1.bf16.msra.mxu0 %v968
        %1030 = vmatprep.subr.bf16.mxu0 0
        %1031 = vmatpush1.bf16.msra.mxu0 %v969
        %1032 = vmatprep.subr.bf16.mxu0 0
        %1033 = vmatpush1.bf16.msra.mxu0 0
        %1034 = vmatprep.subr.bf16.mxu0 0
        %1035 = vmatpush1.bf16.msra.mxu0 0
        %1036 = vmatprep.subr.bf16.mxu0 0
        %1037 = vmatpush1.bf16.msra.mxu0 0
        %1038 = vmatprep.subr.bf16.mxu0 0
        %1039 = vmatpush1.bf16.msra.mxu0 0
        %1040 = vmatprep.subr.bf16.mxu0 0
        %1041 = vmatpush1.bf16.msra.mxu0 0
        %1042 = vmatprep.subr.bf16.mxu0 0
        %1043 = vmatpush1.bf16.msra.mxu0 0
        %1044 = vmatprep.subr.bf16.mxu0 0
        %1045 = vmatpush1.bf16.msra.mxu0 0
        %1046 = vmatprep.subr.bf16.mxu0 0
        %1047 = vmatpush1.bf16.msra.mxu0 0
        %1048 = vmatprep.subr.bf16.mxu0 0
        %1049 = vmatpush1.bf16.msra.mxu0 0
        %1050 = vmatprep.subr.bf16.mxu0 0
        %1051 = vmatpush1.bf16.msra.mxu0 0
        %1052 = vmatprep.subr.bf16.mxu0 0
        %1053 = vmatpush1.bf16.msra.mxu0 0
        %1054 = vmatprep.subr.bf16.mxu0 0
        %1055 = vmatpush1.bf16.msra.mxu0 0
        %1056 = vmatprep.mubr.bf16.mxu0 0
        %1057 = vmatmul.mubr.bf16.gmra.mrb[0].mxu0 %v1022
        %v1058 = vpop.f32.mrb[0].mxu0
        %v1059 = vadd.f32 0.0, %v1058
        %v1060 = vpop.f32.mrb[0].mxu0
        %v1061 = vpop.f32.mrb[0].mxu0
        %v1062 = vadd.f32 0.0, %v1061
        %v1063 = vpop.f32.mrb[0].mxu0
        %1064 = vdwg.mxu0
        %v1065 = vadd.f32 %v340, %v1015
        %v1066 = vadd.f32 %v345, %v1018
        %v1067 = vadd.f32 %v350, %v1059
        %v1068 = vadd.f32 %v355, %v1062
        %v1069 = vld [vmem:[%s4] sm:$0x1]
        %v1071 = vlaneseq
        %v1072 = vshrl.u32 %v1071, 7
        %v1073 = vsub.s32 0, %v1072
        %v1074 = vrot.slane %v1069, %v1073
        %v1076 = vadd.f32 %v1065, %v1074
        %v1077 = vadd.f32 %v1066, %v1074
        %v1078 = vadd.f32 %v1067, %v1074
        %v1079 = vadd.f32 %v1068, %v1074
        %1080 = vst.msk [vmem:[%s238] sm:$0xff] %vm976, %v1076
        %1081 = vst.msk [vmem:[%s238 + $0x8] sm:$0xff] %vm976, %v1077
        %1082 = vst.msk [vmem:[%s238 + $0x10] sm:$0xff] %vm976, %v1078
        %1083 = vst.msk [vmem:[%s238 + $0x18] sm:$0xff] %vm976, %v1079
        %s1084 = sand.u32 %s142, 1
        %s1085 = scalar_lea.sflag [#allocation3], %s1084
        %s1086 = sand.u32 %s142, 1
        %s1087 = smul.addr %s1086, 32
        %s1088 = scalar_lea.vmem [#allocation2], %s1087
        // Predicated region
        $region41: #{graph_cnn_layer_apply.1} parent=39 // pred_check
          %p1089 = pneg %p152
        $region42: #{graph_cnn_layer_apply.1} parent=39 // pred_check_branch
          %1091 = sbr.rel (%p1089) target = $region44
        $region43: #{graph_cnn_layer_apply.1} parent=39 // pred_region
          %s1092 = smul.u32 2, %s19
          %s1094 = ssub.s32 512, 512
          %1095 = vsyncadd %s1085, %s1094
          %s1096 = smul.addr %s1092, 2
          %s1097 = smul.addr %s1096, 128
          %s1098 = scalar_lea.hbm %s5, %s1097
          %s1099 = sshll.u32 %s1088, 4
          %s1100 = int_to_ptr.vmem [resolvable:$true] %s1099
          %1105 = dma.vmem_to_hbm [thread:$0]  %s1100, 512, %s1098, %s1085, 128, 128, 8
        $region44: #{graph_cnn_layer_apply.1} parent=39 // pred_fallthru
          _
      $region40: #{graph_cnn_layer_apply.1} parent=5 // pred_fallthru
        _
      %p1106 = scmp.le.s32.totalorder 2, %s14
      // Predicated region
      $region45: #{graph_cnn_layer_apply.1} parent=5 // pred_check
        %p1107 = pneg %p1106
      $region46: #{graph_cnn_layer_apply.1} parent=5 // pred_check_branch
        %1109 = sbr.rel (%p1107) target = $region48
      $region47: #{graph_cnn_layer_apply.1} parent=5 // pred_region
        %s1110 = ssub.s32 %s14, 2
        // Predicated region
        $region49: #{graph_cnn_layer_apply.1} parent=47 // pred_check
          %p1111 = pneg %p158
        $region50: #{graph_cnn_layer_apply.1} parent=47 // pred_check_branch
          %1113 = sbr.rel (%p1111) target = $region52
        $region51: #{graph_cnn_layer_apply.1} parent=47 // pred_region
          %s1114 = sand.u32 %s143, 1
          %s1115 = scalar_lea.sflag [#allocation3], %s1114
          %s1116 = sand.u32 %s143, 1
          %s1117 = smul.addr %s1116, 32
          %s1118 = scalar_lea.vmem [#allocation2], %s1117
          %1119 = dma.done %s1115, 512
        $region52: #{graph_cnn_layer_apply.1} parent=47 // pred_fallthru
          _
      $region48: #{graph_cnn_layer_apply.1} parent=5 // pred_fallthru
        _
    $region6: #{graph_cnn_layer_apply.1} parent=1 // loop_footer
      %s18 = sadd.s32 1, %s14
    $region7: #{graph_cnn_layer_apply.1} parent=1 // loop_footer_branch
      %13 = sbr.rel target = $region3
    $region8: #{graph_cnn_layer_apply.1} parent=1 // loop_exit
      _
    %1120 = vsyncpa [#allocation3], 1
    %s1121 = scalar_lea.sflag [#allocation3], 1
    %1122 = vsyncpa %s1121, 1

</llo_original>
